<compile_context>
chip_gen: v7x
topology: tpu7x:2x2x1
jax: 0.10.0
libtpu: 0.0.40
codegen_flags: <defaults>
</compile_context>

<pallas_src>
import jax
import jax.numpy as jnp
from jax.experimental import pallas as pl
from jax.experimental.pallas import tpu as pltpu

IN_FEATURES = 3
HIDDEN = 20
OUT_FEATURES = 3


def _round_up(n, m):
    return ((n + m - 1) // m) * m


def _mlp_kernel(x_ref, w1_ref, b1_ref, w2_ref, b2_ref, o_ref):
    """One batch tile, feature-major (features on sublanes, batch on lanes).

    x_ref : (3,  TB)  input tile (streamed over the batch grid)
    w1_ref: (20, 3)   fc1.weight (torch layout), VMEM-resident
    b1_ref: (20, 1)   fc1.bias
    w2_ref: (3, 20)   fc2.weight
    b2_ref: (3, 1)    fc2.bias
    o_ref : (3,  TB)  output tile
    """
    x = x_ref[...]                                              # (3, TB) f32
    # Layer 1 on the MXU: (20,3) @ (3,TB) -> (20,TB); bias broadcast; tanh on EUP.
    h = jnp.tanh(
        jnp.dot(w1_ref[...], x, preferred_element_type=jnp.float32) + b1_ref[...])
    # Layer 2 on the MXU: (3,20) @ (20,TB) -> (3,TB).
    y = jnp.dot(w2_ref[...], h, preferred_element_type=jnp.float32) + b2_ref[...]
    o_ref[...] = y.astype(o_ref.dtype)


def _tile_policy(batch):
    """Generation-specific batch-tile cap, scoped-VMEM limit, and 2-TC splitting."""
    try:
        kind = jax.devices()[0].device_kind.lower()
    except Exception:
        kind = ""
    if "v7" in kind or "7x" in kind:
        # v7x: 64 MiB VMEM per TC, 2 TensorCores -> want >= 2 grid steps.
        cap, vmem, split2 = 96 * 1024, 48 << 20, True
    elif "v6" in kind:
        # v6e: 128 MiB physical VMEM, ~1.4 TB/s HBM -> big tiles, raised limit.
        cap, vmem, split2 = 128 * 1024, 64 << 20, False
    elif "v5p" in kind:
        cap, vmem, split2 = 128 * 1024, 64 << 20, False
    else:
        # v5e (16 MiB default scoped VMEM) and unknown parts: stay conservative.
        cap, vmem, split2 = 32 * 1024, None, False

    bp = _round_up(max(batch, 1), 128)
    tb = min(cap, bp)
    if split2 and bp >= 256:
        # Ensure both TensorCores get at least one batch tile.
        tb = min(tb, _round_up(pl.cdiv(bp, 2), 128))
    return _round_up(tb, 128), vmem


def nibsnet_forward_fm(x_fm, w1, b1, w2, b2, *, tile_b=None):
    """Feature-major forward: x_fm is (3, B) f32, returns (3, B) f32.

    Preferred entry point: batch maps to the 128-lane axis inside the kernel
    (lane-dense DMA/stores) and no wrapper transpose or pad copies are made.
    """
    K, B = x_fm.shape
    assert K == IN_FEATURES, f"expected ({IN_FEATURES}, B) input, got {x_fm.shape}"

    tb, vmem_limit = _tile_policy(B)
    if tile_b is not None:
        tb = _round_up(min(tile_b, _round_up(B, 128)), 128)
    grid = (pl.cdiv(B, tb),)   # ragged last tile handled by Pallas boundary masking

    b1c = b1.reshape(HIDDEN, 1).astype(jnp.float32)
    b2c = b2.reshape(OUT_FEATURES, 1).astype(jnp.float32)

    cost = pl.CostEstimate(
        flops=2 * (IN_FEATURES * HIDDEN + HIDDEN * OUT_FEATURES) * B,
        transcendentals=HIDDEN * B,
        bytes_accessed=4 * (IN_FEATURES + OUT_FEATURES) * B
        + 4 * (HIDDEN * IN_FEATURES + HIDDEN + OUT_FEATURES * HIDDEN + OUT_FEATURES),
    )

    cp_kwargs = dict(dimension_semantics=("parallel",))
    if vmem_limit is not None:
        cp_kwargs["vmem_limit_bytes"] = vmem_limit

    return pl.pallas_call(
        _mlp_kernel,
        out_shape=jax.ShapeDtypeStruct((OUT_FEATURES, B), jnp.float32),
        grid=grid,
        in_specs=[
            # x: streamed, lane-dense batch tiles.
            pl.BlockSpec((IN_FEATURES, tb), lambda i: (0, i)),
            # Params: full-array blocks, constant index map -> VMEM-resident.
            pl.BlockSpec((HIDDEN, IN_FEATURES), lambda i: (0, 0)),
            pl.BlockSpec((HIDDEN, 1), lambda i: (0, 0)),
            pl.BlockSpec((OUT_FEATURES, HIDDEN), lambda i: (0, 0)),
            pl.BlockSpec((OUT_FEATURES, 1), lambda i: (0, 0)),
        ],
        out_specs=pl.BlockSpec((OUT_FEATURES, tb), lambda i: (0, i)),
        compiler_params=pltpu.CompilerParams(**cp_kwargs),
        cost_estimate=cost,
    )(x_fm, w1, b1c, w2, b2c)


def nibsnet_forward(x, w1, b1, w2, b2, *, tile_b=None):
    """Torch-layout forward: x is (B, 3), returns (B, 3) — matches NibsNetRVLPyTorch.

    The .T calls here are layout plumbing for torch compatibility only; perf-sensitive
    callers should keep their activations feature-major and use nibsnet_forward_fm.
    """
    return nibsnet_forward_fm(x.T, w1, b1, w2, b2, tile_b=tile_b).T


def init_params(key):
    """Deterministic init matching torch.nn.Linear default U(-1/sqrt(fan_in), +...)."""
    k1, k2, k3, k4 = jax.random.split(key, 4)
    lim1 = 1.0 / jnp.sqrt(float(IN_FEATURES))
    lim2 = 1.0 / jnp.sqrt(float(HIDDEN))
    w1 = jax.random.uniform(k1, (HIDDEN, IN_FEATURES), jnp.float32, -lim1, lim1)   # fc1.weight
    b1 = jax.random.uniform(k2, (HIDDEN,), jnp.float32, -lim1, lim1)                # fc1.bias
    w2 = jax.random.uniform(k3, (OUT_FEATURES, HIDDEN), jnp.float32, -lim2, lim2)   # fc2.weight
    b2 = jax.random.uniform(k4, (OUT_FEATURES,), jnp.float32, -lim2, lim2)          # fc2.bias
    return w1, b1, w2, b2


def reference_forward(x, w1, b1, w2, b2):
    h = jnp.tanh(x @ w1.T + b1)
    return h @ w2.T + b2


if __name__ == "__main__":
    key = jax.random.PRNGKey(0)
    kx, kx2, kp = jax.random.split(key, 3)
    w1, b1, w2, b2 = init_params(kp)

    # 1) Small batch through the torch-layout wrapper (single ragged tile, B < 128).
    batch = 8
    x = jax.random.normal(kx, (batch, IN_FEATURES), jnp.float32)
    out = jax.block_until_ready(nibsnet_forward(x, w1, b1, w2, b2))
    ref = reference_forward(x, w1, b1, w2, b2)
    assert out.shape == (batch, OUT_FEATURES)
    assert jnp.allclose(out, ref, atol=1e-5, rtol=1e-5), "mismatch vs pure-JAX reference"

    # 2) Batch not a multiple of 128 (ragged tail masking on real hardware).
    batch2 = 300
    x2 = jax.random.normal(kx2, (batch2, IN_FEATURES), jnp.float32)
    out2 = jax.block_until_ready(nibsnet_forward(x2, w1, b1, w2, b2))
    ref2 = reference_forward(x2, w1, b1, w2, b2)
    assert out2.shape == (batch2, OUT_FEATURES)
    assert jnp.allclose(out2, ref2, atol=1e-5, rtol=1e-5), "mismatch (ragged batch)"

    # 3) Feature-major API with a multi-step grid and a ragged last tile
    #    (tile_b=128 -> grid of 3 steps over B=300).
    out3_fm = jax.block_until_ready(
        nibsnet_forward_fm(x2.T, w1, b1, w2, b2, tile_b=128))
    assert out3_fm.shape == (OUT_FEATURES, batch2)
    assert jnp.allclose(out3_fm.T, ref2, atol=1e-5, rtol=1e-5), "mismatch (multi-tile fm)"

    print("KERNEL_OK")
</pallas_src>

<mosaic_0001>
module attributes {stable_mosaic.version = 11 : i64} {
  func.func @_mlp_kernel(%arg0: i32, %arg1: memref<3x128xf32, #tpu.memory_space<vmem>>, %arg2: memref<20x3xf32, #tpu.memory_space<vmem>>, %arg3: memref<20x1xf32, #tpu.memory_space<vmem>>, %arg4: memref<3x20xf32, #tpu.memory_space<vmem>>, %arg5: memref<3x1xf32, #tpu.memory_space<vmem>>, %arg6: memref<3x128xf32, #tpu.memory_space<vmem>>) attributes {dimension_semantics = [#tpu.dimension_semantics<parallel>], iteration_bounds = array<i64: 1>, scalar_prefetch = 0 : i64, scratch_operands = 0 : i64, tpu.core_type = #tpu.core_type<tc>, window_params = [{transform_indices = @transform_0, window_bounds = array<i64: 3, 128>}, {pipeline_mode = #tpu.pipeline_mode<synchronous>, transform_indices = @transform_1, window_bounds = array<i64: 20, 3>}, {pipeline_mode = #tpu.pipeline_mode<synchronous>, transform_indices = @transform_2, window_bounds = array<i64: 20, 1>}, {pipeline_mode = #tpu.pipeline_mode<synchronous>, transform_indices = @transform_3, window_bounds = array<i64: 3, 20>}, {pipeline_mode = #tpu.pipeline_mode<synchronous>, transform_indices = @transform_4, window_bounds = array<i64: 3, 1>}, {transform_indices = @transform_5, window_bounds = array<i64: 3, 128>}]} {
    %c0 = arith.constant 0 : index
    %c0_0 = arith.constant 0 : index
    %0 = vector.load %arg1[%c0, %c0_0] : memref<3x128xf32, #tpu.memory_space<vmem>>, vector<3x128xf32>
    %c0_1 = arith.constant 0 : index
    %c0_2 = arith.constant 0 : index
    %1 = vector.load %arg2[%c0_1, %c0_2] : memref<20x3xf32, #tpu.memory_space<vmem>>, vector<20x3xf32>
    %cst = arith.constant dense<0.000000e+00> : vector<20x128xf32>
    %2 = tpu.matmul %1, %0, %cst {dimension_numbers = #tpu.dot_dimension_numbers<[1], [0], [0], [1], [0, 0, 1, 1], [], []>} : vector<20x3xf32>, vector<3x128xf32>, vector<20x128xf32> -> vector<20x128xf32>
    %c0_3 = arith.constant 0 : index
    %c0_4 = arith.constant 0 : index
    %3 = vector.load %arg3[%c0_3, %c0_4] : memref<20x1xf32, #tpu.memory_space<vmem>>, vector<20x1xf32>
    %4 = vector.broadcast %3 : vector<20x1xf32> to vector<20x128xf32>
    %5 = arith.addf %2, %4 : vector<20x128xf32>
    %6 = math.tanh %5 : vector<20x128xf32>
    %c0_5 = arith.constant 0 : index
    %c0_6 = arith.constant 0 : index
    %7 = vector.load %arg4[%c0_5, %c0_6] : memref<3x20xf32, #tpu.memory_space<vmem>>, vector<3x20xf32>
    %cst_7 = arith.constant dense<0.000000e+00> : vector<3x128xf32>
    %8 = tpu.matmul %7, %6, %cst_7 {dimension_numbers = #tpu.dot_dimension_numbers<[1], [0], [0], [1], [0, 0, 1, 1], [], []>} : vector<3x20xf32>, vector<20x128xf32>, vector<3x128xf32> -> vector<3x128xf32>
    %c0_8 = arith.constant 0 : index
    %c0_9 = arith.constant 0 : index
    %9 = vector.load %arg5[%c0_8, %c0_9] : memref<3x1xf32, #tpu.memory_space<vmem>>, vector<3x1xf32>
    %10 = vector.broadcast %9 : vector<3x1xf32> to vector<3x128xf32>
    %11 = arith.addf %8, %10 : vector<3x128xf32>
    %c0_10 = arith.constant 0 : index
    %c0_11 = arith.constant 0 : index
    %12 = vector.load %arg6[%c0_10, %c0_11] : memref<3x128xf32, #tpu.memory_space<vmem>>, vector<3x128xf32>
    tpu.vector_store %arg6[%c0_10, %c0_11], %11 {strides = array<i32>} : memref<3x128xf32, #tpu.memory_space<vmem>>, vector<3x128xf32>,
    return
  }
  func.func @transform_0(%arg0: i32) -> (i32, i32) {
    %c0_i32 = arith.constant 0 : i32
    %c0_i32_0 = arith.constant 0 : i32
    return %c0_i32, %arg0 : i32, i32
  }
  func.func @transform_1(%arg0: i32) -> (i32, i32) {
    %c0_i32 = arith.constant 0 : i32
    %c0_i32_0 = arith.constant 0 : i32
    %c0_i32_1 = arith.constant 0 : i32
    return %c0_i32, %c0_i32_0 : i32, i32
  }
  func.func @transform_2(%arg0: i32) -> (i32, i32) {
    %c0_i32 = arith.constant 0 : i32
    %c0_i32_0 = arith.constant 0 : i32
    %c0_i32_1 = arith.constant 0 : i32
    return %c0_i32, %c0_i32_0 : i32, i32
  }
  func.func @transform_3(%arg0: i32) -> (i32, i32) {
    %c0_i32 = arith.constant 0 : i32
    %c0_i32_0 = arith.constant 0 : i32
    %c0_i32_1 = arith.constant 0 : i32
    return %c0_i32, %c0_i32_0 : i32, i32
  }
  func.func @transform_4(%arg0: i32) -> (i32, i32) {
    %c0_i32 = arith.constant 0 : i32
    %c0_i32_0 = arith.constant 0 : i32
    %c0_i32_1 = arith.constant 0 : i32
    return %c0_i32, %c0_i32_0 : i32, i32
  }
  func.func @transform_5(%arg0: i32) -> (i32, i32) {
    %c0_i32 = arith.constant 0 : i32
    %c0_i32_0 = arith.constant 0 : i32
    return %c0_i32, %arg0 : i32, i32
  }
}

</mosaic_0001>

<llo_original>
// kernel: tpu_custom_call.1
$region0: #{tpu_custom_call.1}
  #allocation0 [shape = 'u32[]', space=smem, size = 0x4, offset = 0x4, fixed_abs, tag = 'smem constant byte address 0x4 - core index']
  #allocation1 [shape = 'u32[144,128]{1,0:T(1,128)}', space=vmem, size = 0x12000, scoped, tag = 'internal scratch']
  %s0 = inlined_call_operand.vmem [shape: f32[3,8], index: 0, kind: input, shape index: {}]
  %s1 = inlined_call_operand.vmem [shape: f32[20,3], index: 1, kind: input, shape index: {}]
  %s2 = inlined_call_operand.vmem [shape: f32[20,1], index: 2, kind: input, shape index: {}]
  %s3 = inlined_call_operand.vmem [shape: f32[3,20], index: 3, kind: input, shape index: {}]
  %s4 = inlined_call_operand.vmem [shape: f32[3,1], index: 4, kind: input, shape index: {}]
  %s5 = inlined_call_operand.hbm [shape: f32[3,8], index: 5, kind: output, shape index: {}]
  %s6 = sld [smem:[#allocation0]]
  $region30: #{tpu_custom_call.1} parent=0
    _
  %s8 = ssub.s32 1, %s6
  %s9 = scalar_select 0, %s8, %s6
  $region1: #{tpu_custom_call.1} parent=0
    #allocation2 [shape = 'u8[2048]{0}', space=vmem, size = 0x800, scoped, tag = 'output window, operand 0, single buffered']
    #allocation3 [shape = 's32[1]{0}', space=sflag, size = 0x4, scoped, tag = 'scoped memory for tpu_custom_call.1']
    %10 = vsyncpa [#allocation3], 0
    // Predicated region
    $region2: #{tpu_custom_call.1} parent=1 // pred_check
      _
    $region3: #{tpu_custom_call.1} parent=1 // pred_check_branch
      %12 = sbr.rel (0) target = $region5
    $region4: #{tpu_custom_call.1} parent=1 // pred_region
      _
    $region5: #{tpu_custom_call.1} parent=1 // pred_fallthru
      _
    // Predicated region
    $region6: #{tpu_custom_call.1} parent=1 // pred_check
      _
    $region7: #{tpu_custom_call.1} parent=1 // pred_check_branch
      %14 = sbr.rel (0) target = $region9
    $region8: #{tpu_custom_call.1} parent=1 // pred_region
      _
    $region9: #{tpu_custom_call.1} parent=1 // pred_fallthru
      _
    // Predicated region
    $region10: #{tpu_custom_call.1} parent=1 // pred_check
      _
    $region11: #{tpu_custom_call.1} parent=1 // pred_check_branch
      %16 = sbr.rel (0) target = $region13
    $region12: #{tpu_custom_call.1} parent=1 // pred_region
      _
    $region13: #{tpu_custom_call.1} parent=1 // pred_fallthru
      _
    // Predicated region
    $region14: #{tpu_custom_call.1} parent=1 // pred_check
      _
    $region15: #{tpu_custom_call.1} parent=1 // pred_check_branch
      %18 = sbr.rel (0) target = $region17
    $region16: #{tpu_custom_call.1} parent=1 // pred_region
      _
    $region17: #{tpu_custom_call.1} parent=1 // pred_fallthru
      _
    // Predicated region
    $region18: #{tpu_custom_call.1} parent=1 // pred_check
      _
    $region19: #{tpu_custom_call.1} parent=1 // pred_check_branch
      %20 = sbr.rel (0) target = $region21
    $region20: #{tpu_custom_call.1} parent=1 // pred_region
      _
    $region21: #{tpu_custom_call.1} parent=1 // pred_fallthru
      _
    %v21 = vld [vmem:[%s0] sm:$0x7]
    %v22 = vld [vmem:[%s1] sm:$0xff]
    %v23 = vld [vmem:[%s1 + $0x8] sm:$0xff]
    %v24 = vld [vmem:[%s1 + $0x10] sm:$0xf]
    %v25 = vld [vmem:[%s2] sm:$0xff]
    %v26 = vld [vmem:[%s2 + $0x8] sm:$0xff]
    %v27 = vld [vmem:[%s2 + $0x10] sm:$0xf]
    %29 = vset.pattern.permute.xlu0 0
    %30 = vperm.xlu0 %29, %v25
    %v31 = vpop.permute.xlu0 %30
    %34 = vset.pattern.permute.xlu0 0
    %35 = vperm.xlu0 %34, %v26
    %v36 = vpop.permute.xlu0 %35
    %39 = vset.pattern.permute.xlu0 0
    %40 = vperm.xlu0 %39, %v27
    %v41 = vpop.permute.xlu0 %40
    %vm43 = vcmask 23552
    %v45 = vsel %vm43, %v22, 0
    %v48 = vsel %vm43, %v23, 0
    %v51 = vsel %vm43, %v24, 0
    %vm53 = vcmask 1042432
    %v55 = vsel %vm53, %v21, 0
    %57 = vmatprep.subr.mxu0 0.0
    %58 = vmatpush1.msra.mxu0 %v55
    %59 = vmatprep.subr.mxu0 0.0
    %60 = vmatpush1.msra.mxu0 0.0
    %61 = vmatprep.subr.mxu0 0.0
    %62 = vmatpush1.msra.mxu0 0.0
    %63 = vmatprep.subr.mxu0 0.0
    %64 = vmatpush1.msra.mxu0 0.0
    %65 = vmatprep.subr.mxu0 0.0
    %66 = vmatpush1.msra.mxu0 0.0
    %67 = vmatprep.subr.mxu0 0.0
    %68 = vmatpush1.msra.mxu0 0.0
    %69 = vmatprep.subr.mxu0 0.0
    %70 = vmatpush1.msra.mxu0 0.0
    %71 = vmatprep.subr.mxu0 0.0
    %72 = vmatpush1.msra.mxu0 0.0
    %73 = vmatprep.subr.mxu0 0.0
    %74 = vmatpush1.msra.mxu0 0.0
    %75 = vmatprep.subr.mxu0 0.0
    %76 = vmatpush1.msra.mxu0 0.0
    %77 = vmatprep.subr.mxu0 0.0
    %78 = vmatpush1.msra.mxu0 0.0
    %79 = vmatprep.subr.mxu0 0.0
    %80 = vmatpush1.msra.mxu0 0.0
    %81 = vmatprep.subr.mxu0 0.0
    %82 = vmatpush1.msra.mxu0 0.0
    %83 = vmatprep.subr.mxu0 0.0
    %84 = vmatpush1.msra.mxu0 0.0
    %85 = vmatprep.subr.mxu0 0.0
    %86 = vmatpush1.msra.mxu0 0.0
    %87 = vmatprep.subr.mxu0 0.0
    %88 = vmatpush1.msra.mxu0 0.0
    %89 = vmatprep.subr.mxu0 0.0
    %90 = vmatpush1.msra.mxu0 0.0
    %91 = vmatprep.subr.mxu0 0.0
    %92 = vmatpush1.msra.mxu0 0.0
    %93 = vmatprep.subr.mxu0 0.0
    %94 = vmatpush1.msra.mxu0 0.0
    %95 = vmatprep.subr.mxu0 0.0
    %96 = vmatpush1.msra.mxu0 0.0
    %97 = vmatprep.subr.mxu0 0.0
    %98 = vmatpush1.msra.mxu0 0.0
    %99 = vmatprep.subr.mxu0 0.0
    %100 = vmatpush1.msra.mxu0 0.0
    %101 = vmatprep.subr.mxu0 0.0
    %102 = vmatpush1.msra.mxu0 0.0
    %103 = vmatprep.subr.mxu0 0.0
    %104 = vmatpush1.msra.mxu0 0.0
    %105 = vmatprep.subr.mxu0 0.0
    %106 = vmatpush1.msra.mxu0 0.0
    %107 = vmatprep.subr.mxu0 0.0
    %108 = vmatpush1.msra.mxu0 0.0
    %109 = vmatprep.subr.mxu0 0.0
    %110 = vmatpush1.msra.mxu0 0.0
    %111 = vmatprep.subr.mxu0 0.0
    %112 = vmatpush1.msra.mxu0 0.0
    %113 = vmatprep.subr.mxu0 0.0
    %114 = vmatpush1.msra.mxu0 0.0
    %115 = vmatprep.subr.mxu0 0.0
    %116 = vmatpush1.msra.mxu0 0.0
    %117 = vmatprep.subr.mxu0 0.0
    %118 = vmatpush1.msra.mxu0 0.0
    %119 = vmatprep.subr.mxu0 0.0
    %120 = vmatpush1.msra.mxu0 0.0
    %121 = vmatprep.mubr.f32.mxu0 0.0
    %122 = vmatmul.mubr.f32.gmra.mrb[0].mxu0 %v45
    %v123 = vpop.f32.mrb[0].mxu0
    %v124 = vadd.f32 %v31, %v123
    %v125 = vpop.f32.mrb[0].mxu0
    %126 = vmatprep.mubr.f32.mxu0 0.0
    %127 = vmatmul.mubr.f32.gmra.mrb[0].mxu0 %v48
    %v128 = vpop.f32.mrb[0].mxu0
    %v129 = vadd.f32 %v36, %v128
    %v130 = vpop.f32.mrb[0].mxu0
    %131 = vmatprep.mubr.f32.mxu0 0.0
    %132 = vmatmul.mubr.f32.gmra.mrb[0].mxu0 %v51
    %v133 = vpop.f32.mrb[0].mxu0
    %v134 = vadd.f32 %v41, %v133
    %v135 = vpop.f32.mrb[0].mxu0
    %136 = vdwg.mxu0
    %v137 = vtanh.pop %v124
    %v138 = vtanh.pop %v129
    %v139 = vtanh.pop %v134
    %v140 = vld [vmem:[%s3] sm:$0x7]
    %v141 = vld [vmem:[%s4] sm:$0x7]
    %143 = vset.pattern.permute.xlu0 0
    %144 = vperm.xlu0 %143, %v141
    %v145 = vpop.permute.xlu0 %144
    %vm147 = vcmask 162816
    %v149 = vsel %vm147, %v140, 0
    %vm151 = vcmask 1043456
    %v153 = vsel %vm151, %v139, 0
    %155 = vmatprep.subr.mxu0 0.0
    %156 = vmatpush1.msra.mxu0 %v137
    %157 = vmatprep.subr.mxu0 0.0
    %158 = vmatpush1.msra.mxu0 %v138
    %159 = vmatprep.subr.mxu0 0.0
    %160 = vmatpush1.msra.mxu0 %v153
    %161 = vmatprep.subr.mxu0 0.0
    %162 = vmatpush1.msra.mxu0 0.0
    %163 = vmatprep.subr.mxu0 0.0
    %164 = vmatpush1.msra.mxu0 0.0
    %165 = vmatprep.subr.mxu0 0.0
    %166 = vmatpush1.msra.mxu0 0.0
    %167 = vmatprep.subr.mxu0 0.0
    %168 = vmatpush1.msra.mxu0 0.0
    %169 = vmatprep.subr.mxu0 0.0
    %170 = vmatpush1.msra.mxu0 0.0
    %171 = vmatprep.subr.mxu0 0.0
    %172 = vmatpush1.msra.mxu0 0.0
    %173 = vmatprep.subr.mxu0 0.0
    %174 = vmatpush1.msra.mxu0 0.0
    %175 = vmatprep.subr.mxu0 0.0
    %176 = vmatpush1.msra.mxu0 0.0
    %177 = vmatprep.subr.mxu0 0.0
    %178 = vmatpush1.msra.mxu0 0.0
    %179 = vmatprep.subr.mxu0 0.0
    %180 = vmatpush1.msra.mxu0 0.0
    %181 = vmatprep.subr.mxu0 0.0
    %182 = vmatpush1.msra.mxu0 0.0
    %183 = vmatprep.subr.mxu0 0.0
    %184 = vmatpush1.msra.mxu0 0.0
    %185 = vmatprep.subr.mxu0 0.0
    %186 = vmatpush1.msra.mxu0 0.0
    %187 = vmatprep.subr.mxu0 0.0
    %188 = vmatpush1.msra.mxu0 0.0
    %189 = vmatprep.subr.mxu0 0.0
    %190 = vmatpush1.msra.mxu0 0.0
    %191 = vmatprep.subr.mxu0 0.0
    %192 = vmatpush1.msra.mxu0 0.0
    %193 = vmatprep.subr.mxu0 0.0
    %194 = vmatpush1.msra.mxu0 0.0
    %195 = vmatprep.subr.mxu0 0.0
    %196 = vmatpush1.msra.mxu0 0.0
    %197 = vmatprep.subr.mxu0 0.0
    %198 = vmatpush1.msra.mxu0 0.0
    %199 = vmatprep.subr.mxu0 0.0
    %200 = vmatpush1.msra.mxu0 0.0
    %201 = vmatprep.subr.mxu0 0.0
    %202 = vmatpush1.msra.mxu0 0.0
    %203 = vmatprep.subr.mxu0 0.0
    %204 = vmatpush1.msra.mxu0 0.0
    %205 = vmatprep.subr.mxu0 0.0
    %206 = vmatpush1.msra.mxu0 0.0
    %207 = vmatprep.subr.mxu0 0.0
    %208 = vmatpush1.msra.mxu0 0.0
    %209 = vmatprep.subr.mxu0 0.0
    %210 = vmatpush1.msra.mxu0 0.0
    %211 = vmatprep.subr.mxu0 0.0
    %212 = vmatpush1.msra.mxu0 0.0
    %213 = vmatprep.subr.mxu0 0.0
    %214 = vmatpush1.msra.mxu0 0.0
    %215 = vmatprep.subr.mxu0 0.0
    %216 = vmatpush1.msra.mxu0 0.0
    %217 = vmatprep.subr.mxu0 0.0
    %218 = vmatpush1.msra.mxu0 0.0
    %219 = vmatprep.mubr.f32.mxu0 0.0
    %220 = vmatmul.mubr.f32.gmra.mrb[0].mxu0 %v149
    %v221 = vpop.f32.mrb[0].mxu0
    %v222 = vadd.f32 %v145, %v221
    %v223 = vpop.f32.mrb[0].mxu0
    %224 = vdwg.mxu0
    %225 = vst [vmem:[#allocation2] sm:$0x7] %v222
    // Predicated region
    $region22: #{tpu_custom_call.1} parent=1 // pred_check
      _
    $region23: #{tpu_custom_call.1} parent=1 // pred_check_branch
      %227 = sbr.rel (0) target = $region25
    $region24: #{tpu_custom_call.1} parent=1 // pred_region
      %s229 = ssub.s32 64, 64
      %230 = vsyncadd [#allocation3], %s229
      %s232 = sshll.u32 [#allocation2], 4
      %s233 = int_to_ptr.vmem [resolvable:$true] %s232
      %235 = dma.vmem_to_hbm [thread:$0]  %s233, 64, %s5, [#allocation3]
    $region25: #{tpu_custom_call.1} parent=1 // pred_fallthru
      _
    // Predicated region
    $region26: #{tpu_custom_call.1} parent=1 // pred_check
      _
    $region27: #{tpu_custom_call.1} parent=1 // pred_check_branch
      %237 = sbr.rel (0) target = $region29
    $region28: #{tpu_custom_call.1} parent=1 // pred_region
      %238 = dma.done [#allocation3], 64
    $region29: #{tpu_custom_call.1} parent=1 // pred_fallthru
      _
    %239 = vsyncpa [#allocation3], 1

</llo_original>
